<compile_context>
chip_gen: v7x
topology: tpu7x:2x2x1
jax: 0.10.0
libtpu: 0.0.40
codegen_flags: <defaults>
</compile_context>

<pallas_src>
import functools

import jax
import jax.numpy as jnp
import numpy as np
from jax.experimental import pallas as pl
from jax.experimental.pallas import tpu as pltpu

# ---- hyper-parameters (match SpatioTemporalModel.__init__) ----
INPUT_FEATURES = 4
DENSE_HIDDEN = 8
CONV_CHANNELS = 4
KERNEL_SIZE = 3
RNN_HIDDEN = 32
X_DIM, Y_DIM = 32, 32          # the module hardcodes (X, Y) = (32, 32) for the RNN
BATCH, TIME = 2, 4

IMGS_PER_STEP = 4              # rows = 4*32 = 128 fills the MXU M dim; grid = bt/4 = 2


# --------------------------------------------------------------------------------------
# pltpu.roll rotate-direction probe (run once, outside jit).  Only the direction
# matters for correctness: wrapped rows are zeroed by the per-image edge masks.
# --------------------------------------------------------------------------------------
@functools.lru_cache(maxsize=None)
def _roll_moves_to_higher_index():
    def probe(x_ref, o_ref):
        o_ref[...] = pltpu.roll(x_ref[...], 1, 0)

    x = jnp.tile(jnp.arange(8, dtype=jnp.float32)[:, None], (1, 128))
    out = pl.pallas_call(probe, out_shape=jax.ShapeDtypeStruct((8, 128), jnp.float32))(x)
    try:
        return bool(np.asarray(out)[1, 0] == 0.0)   # jnp.roll convention: out[r] = in[r-1]
    except Exception:                                # called under tracing un-primed
        return True


# ---------------- Kernel A: dense + .view scramble + conv1 + conv2, fused --------------
def spatial_kernel(xb_ref, w1_ref, b1_ref, w2_ref, b2_ref, out_ref,
                   *, xs, shift_dn, shift_up):
    imgs, _, lanes_in = xb_ref.shape
    rows = imgs * xs
    x0 = xb_ref[...].reshape(rows, lanes_in)         # free: collapse (imgs, xs) rows

    def conv_relu(act, w_ref, bias):
        # 3x3 'same' conv as ONE bf16 MXU dot per layer:
        #   x-taps  -> XLU sublane rotations, cross-image / wrapped rows zeroed on VPU,
        #   y-taps + y zero-padding -> folded into the banded (3*lanes, lanes) weight.
        r = jax.lax.broadcasted_iota(jnp.int32, act.shape, 0) % xs
        dn = jnp.where(r != 0, pltpu.roll(act, shift_dn, 0), 0.0)       # act[x-1]
        up = jnp.where(r != xs - 1, pltpu.roll(act, shift_up, 0), 0.0)  # act[x+1]
        lhs = jnp.concatenate([dn, act, up], axis=1).astype(jnp.bfloat16)
        y = jnp.dot(lhs, w_ref[...], preferred_element_type=jnp.float32) + bias
        return jnp.maximum(y, 0.0)

    c1 = conv_relu(x0, w1_ref, b1_ref[...])   # feature_dense folded into w1 / row bias
    c2 = conv_relu(c1, w2_ref, b2_ref[...])
    out_ref[...] = c2.reshape(out_ref.shape).astype(out_ref.dtype)


# ---------------- Kernel B: LSTM gate projection + recurrence + fc ---------------------
def lstm_fc_kernel(seq_ref, wih_ref, bg_ref, whh_ref, wfc_ref, bfc_ref, out_ref,
                   *, batch, time, hidden):
    # Gate input projection for every (t, b) row at once: bf16 operands, f32 accumulate.
    gx = jnp.dot(seq_ref[...], wih_ref[...],
                 preferred_element_type=jnp.float32) + bg_ref[...]          # (T*B, 4H)

    h = jnp.zeros((batch, hidden), jnp.float32)
    c = jnp.zeros((batch, hidden), jnp.float32)
    for t in range(time):                        # short, static: fully unrolled
        g = gx[t * batch:(t + 1) * batch, :] + jnp.dot(
            h.astype(jnp.bfloat16), whh_ref[...], preferred_element_type=jnp.float32)
        sg = 1.0 / (1.0 + jnp.exp(-g))           # one sigmoid over all 4H lanes
        th = jnp.tanh(g)                         # one tanh  over all 4H lanes
        i = sg[:, 0 * hidden:1 * hidden]
        f = sg[:, 1 * hidden:2 * hidden]
        gg = th[:, 2 * hidden:3 * hidden]
        o = sg[:, 3 * hidden:4 * hidden]
        c = f * c + i * gg
        h = o * jnp.tanh(c)

    out_ref[...] = (jnp.dot(h, wfc_ref[...], preferred_element_type=jnp.float32)
                    + bfc_ref[0])


# ---------------- host-side weight/layout packing (tiny, one XLA fusion) ---------------
def _banded_conv_mats(w, ys):
    """OIHW conv weights -> per-kh banded matrices.

    mats[kh][ci*ys + yi, co*ys + yo] = w[co, ci, kh, yi - yo + pad] inside the band,
    0 outside, so `act @ mats[kh]` applies every kw tap of x-offset kh with 'same'
    zero padding along y.
    """
    cout, cin, k, _ = w.shape
    pad = k // 2
    yi = np.arange(ys)[:, None]
    yo = np.arange(ys)[None, :]
    kw = yi - yo + pad
    valid = jnp.asarray((kw >= 0) & (kw < k))
    kw_c = np.clip(kw, 0, k - 1)
    mats = []
    for kh in range(k):
        m = w[:, :, kh, :][:, :, kw_c]                       # (cout, cin, ys, ys)
        m = jnp.where(valid[None, None], m, 0.0)
        mats.append(m.transpose(1, 2, 0, 3).reshape(cin * ys, cout * ys))
    return jnp.stack(mats)                                   # (k, cin*ys, cout*ys)


# ---------------- full forward ----------------------------------------------------------
def spatio_temporal_forward(x, p):
    b, t, xs, ys, feats = x.shape
    H, CC, RH, K = DENSE_HIDDEN, CONV_CHANNELS, RNN_HIDDEN, KERNEL_SIZE
    bt = b * t
    assert (xs, ys) == (X_DIM, Y_DIM) and feats == INPUT_FEATURES
    assert K == 3 and xs % H == 0 and ys % H == 0 and bt % IMGS_PER_STEP == 0
    lanes_in = H * (ys // H) * feats            # 128
    lanes_out = CC * ys                         # 128
    rows = IMGS_PER_STEP * xs                   # 128
    hp = jax.lax.Precision.HIGHEST              # keep the tiny host-side folds exact

    # Images in t-major order (row n = t*B + b) as lane-dense (X, 128) slabs whose lane
    # order (a*16 + d*4 + f) lets block-diagonal weights reproduce the PyTorch
    # `.view(batch*time, -1, X, Y)` raw reinterpretation exactly.
    xb = (jnp.swapaxes(x, 0, 1)
          .reshape(bt, H, xs // H, H, ys // H, feats)
          .transpose(0, 2, 3, 1, 4, 5)
          .reshape(bt, xs, lanes_in))

    # conv1: banded y-tap matrices with the feature_dense weight folded in (no
    # nonlinearity in between), stacked over the 3 x-taps -> one (3*128, 128) weight.
    m1 = _banded_conv_mats(p["wc1"], ys)                         # (3, H*ys, CC*ys)
    m1r = m1.reshape(K, H, ys // H, H, lanes_out)                # (kh, ci, d, h, out)
    w1cat = (jnp.einsum("hf,kcdho->kcdfo", p["wd"], m1r, precision=hp)
             .reshape(K * lanes_in, lanes_out).astype(jnp.bfloat16))
    # dense bias pushed through each x-tap; image-edge rows miss the shifted taps.
    btap = jnp.einsum("h,kcdho->ko", p["bd"], m1r, precision=hp)  # (3, CC*ys)
    b1_lane = jnp.repeat(p["bc1"], ys).reshape(1, lanes_out)
    xr = jnp.asarray(np.arange(rows) % xs)[:, None]
    b1rows = (b1_lane + btap[1][None, :]
              + jnp.where(xr > 0, btap[0][None, :], 0.0)
              + jnp.where(xr < xs - 1, btap[2][None, :], 0.0))    # (rows, CC*ys)

    # conv2: plain banded weights (its zero padding == the masked rolled rows).
    m2 = _banded_conv_mats(p["wc2"], ys)                          # (3, CC*ys, CC*ys)
    w2cat = m2.reshape(K * lanes_out, lanes_out).astype(jnp.bfloat16)
    b2 = jnp.repeat(p["bc2"], ys).reshape(1, lanes_out)

    roll_fwd = _roll_moves_to_higher_index()      # primed outside jit in __main__
    shift_dn = 1 if roll_fwd else rows - 1
    shift_up = rows - 1 if roll_fwd else 1

    # -------- kernel A: spatial stage, parallel grid over groups of 4 images ----------
    seq = pl.pallas_call(
        functools.partial(spatial_kernel, xs=xs, shift_dn=shift_dn, shift_up=shift_up),
        out_shape=jax.ShapeDtypeStruct((bt, xs, lanes_out), jnp.bfloat16),
        grid=(bt // IMGS_PER_STEP,),
        in_specs=[
            pl.BlockSpec((IMGS_PER_STEP, xs, lanes_in), lambda n: (n, 0, 0)),
            pl.BlockSpec((K * lanes_in, lanes_out), lambda n: (0, 0)),
            pl.BlockSpec((rows, lanes_out), lambda n: (0, 0)),
            pl.BlockSpec((K * lanes_out, lanes_out), lambda n: (0, 0)),
            pl.BlockSpec((1, lanes_out), lambda n: (0, 0)),
        ],
        out_specs=pl.BlockSpec((IMGS_PER_STEP, xs, lanes_out), lambda n: (n, 0, 0)),
        compiler_params=pltpu.CompilerParams(dimension_semantics=("parallel",)),
    )(xb, w1cat, b1rows, w2cat, b2)

    # Free contiguous reshape: row n = t*B + b, column = x*128 + co*32 + yo.
    seq2d = seq.reshape(bt, CC * xs * ys)

    # W_ih columns permuted to kernel A's output layout; bf16 halves the 2 MiB DMA.
    wihp = (p["wih"].reshape(4 * RH, CC, xs, ys)
            .transpose(2, 1, 3, 0)
            .reshape(CC * xs * ys, 4 * RH)
            .astype(jnp.bfloat16))
    bg = (p["bih"] + p["bhh"]).reshape(1, 4 * RH)

    # -------- kernel B: gate projection + T=4 recurrence + fc, single invocation ------
    return pl.pallas_call(
        functools.partial(lstm_fc_kernel, batch=b, time=t, hidden=RH),
        out_shape=jax.ShapeDtypeStruct((b, 1), jnp.float32),
        in_specs=[
            pl.BlockSpec(memory_space=pltpu.MemorySpace.VMEM),   # seq2d (bf16)
            pl.BlockSpec(memory_space=pltpu.MemorySpace.VMEM),   # W_ih permuted (bf16)
            pl.BlockSpec(memory_space=pltpu.MemorySpace.VMEM),   # b_ih + b_hh
            pl.BlockSpec(memory_space=pltpu.MemorySpace.VMEM),   # W_hh^T (bf16)
            pl.BlockSpec(memory_space=pltpu.MemorySpace.VMEM),   # W_fc^T
            pl.BlockSpec(memory_space=pltpu.MemorySpace.SMEM),   # b_fc
        ],
        out_specs=pl.BlockSpec(memory_space=pltpu.MemorySpace.VMEM),
    )(seq2d, wihp, bg, p["whh"].T.astype(jnp.bfloat16), p["wfc"].T, p["bfc"])


# ---------------- pure-JAX reference for validation ------------------------------------
def reference_forward(x, p):
    b, t, xs, ys, feats = x.shape
    y = x.reshape(-1, feats) @ p["wd"].T + p["bd"]
    y = y.reshape(b * t, DENSE_HIDDEN, xs, ys)

    def conv(z, w, bias):
        out = jax.lax.conv_general_dilated(
            z, w, (1, 1), [(1, 1), (1, 1)],
            dimension_numbers=("NCHW", "OIHW", "NCHW"))
        return jnp.maximum(out + bias[None, :, None, None], 0.0)

    y = conv(y, p["wc1"], p["bc1"])
    y = conv(y, p["wc2"], p["bc2"])
    seq = y.reshape(b, t, -1)

    def step(carry, xt):
        h, c = carry
        gates = xt @ p["wih"].T + p["bih"] + h @ p["whh"].T + p["bhh"]
        i, f, g, o = jnp.split(gates, 4, axis=-1)
        i = jax.nn.sigmoid(i); f = jax.nn.sigmoid(f)
        g = jnp.tanh(g); o = jax.nn.sigmoid(o)
        c = f * c + i * g
        h = o * jnp.tanh(c)
        return (h, c), None

    h0 = jnp.zeros((b, RNN_HIDDEN), jnp.float32)
    c0 = jnp.zeros((b, RNN_HIDDEN), jnp.float32)
    (h, _), _ = jax.lax.scan(step, (h0, c0), jnp.swapaxes(seq, 0, 1))
    return h @ p["wfc"].T + p["bfc"]


def init_params(key):
    ks = jax.random.split(key, 12)

    def u(k, shape, fan_in):
        bound = 1.0 / np.sqrt(fan_in)
        return jax.random.uniform(k, shape, jnp.float32, -bound, bound)

    d_in = CONV_CHANNELS * X_DIM * Y_DIM
    k2 = KERNEL_SIZE * KERNEL_SIZE
    return {
        "wd": u(ks[0], (DENSE_HIDDEN, INPUT_FEATURES), INPUT_FEATURES),
        "bd": u(ks[1], (DENSE_HIDDEN,), INPUT_FEATURES),
        "wc1": u(ks[2], (CONV_CHANNELS, DENSE_HIDDEN, KERNEL_SIZE, KERNEL_SIZE),
                 DENSE_HIDDEN * k2),
        "bc1": u(ks[3], (CONV_CHANNELS,), DENSE_HIDDEN * k2),
        "wc2": u(ks[4], (CONV_CHANNELS, CONV_CHANNELS, KERNEL_SIZE, KERNEL_SIZE),
                 CONV_CHANNELS * k2),
        "bc2": u(ks[5], (CONV_CHANNELS,), CONV_CHANNELS * k2),
        "wih": u(ks[6], (4 * RNN_HIDDEN, d_in), RNN_HIDDEN),
        "whh": u(ks[7], (4 * RNN_HIDDEN, RNN_HIDDEN), RNN_HIDDEN),
        "bih": u(ks[8], (4 * RNN_HIDDEN,), RNN_HIDDEN),
        "bhh": u(ks[9], (4 * RNN_HIDDEN,), RNN_HIDDEN),
        "wfc": u(ks[10], (1, RNN_HIDDEN), RNN_HIDDEN),
        "bfc": u(ks[11], (1,), RNN_HIDDEN),
    }


if __name__ == "__main__":
    key = jax.random.PRNGKey(0)
    pkey, xkey = jax.random.split(key)
    params = init_params(pkey)
    x = jax.random.normal(xkey, (BATCH, TIME, X_DIM, Y_DIM, INPUT_FEATURES),
                          dtype=jnp.float32)

    _roll_moves_to_higher_index()          # probe pltpu.roll's direction outside jit

    fwd = jax.jit(spatio_temporal_forward)
    out = jax.block_until_ready(fwd(x, params))

    with jax.default_matmul_precision("highest"):      # exact-f32 reference
        ref = jax.block_until_ready(jax.jit(reference_forward)(x, params))

    assert out.shape == (BATCH, 1)
    # The whole MXU path (convs, W_ih projection, recurrence) now uses bf16 operands
    # with f32 accumulation, so allow a slightly larger margin than the old f32 path.
    np.testing.assert_allclose(np.asarray(out), np.asarray(ref), rtol=3e-2, atol=3e-2)
    print("KERNEL_OK")
</pallas_src>

<mosaic_0001>
module attributes {stable_mosaic.version = 11 : i64} {
  func.func @probe(%arg0: memref<8x128xf32, #tpu.memory_space<vmem>>, %arg1: memref<8x128xf32, #tpu.memory_space<vmem>>) attributes {dimension_semantics = [], scalar_prefetch = 0 : i64, scratch_operands = 0 : i64, tpu.core_type = #tpu.core_type<tc>} {
    %c0 = arith.constant 0 : index
    %c0_0 = arith.constant 0 : index
    %0 = vector.load %arg0[%c0, %c0_0] : memref<8x128xf32, #tpu.memory_space<vmem>>, vector<8x128xf32>
    %c1_i32 = arith.constant 1 : i32
    %1 = tpu.dynamic_rotate %0 by %c1_i32 dim 0 : vector<8x128xf32>, i32 -> vector<8x128xf32>
    %c0_1 = arith.constant 0 : index
    %c0_2 = arith.constant 0 : index
    %2 = vector.load %arg1[%c0_1, %c0_2] : memref<8x128xf32, #tpu.memory_space<vmem>>, vector<8x128xf32>
    tpu.vector_store %arg1[%c0_1, %c0_2], %1 {strides = array<i32>} : memref<8x128xf32, #tpu.memory_space<vmem>>, vector<8x128xf32>,
    return
  }
}

</mosaic_0001>

<llo_original>
// kernel: tpu_custom_call.1
$region0: #{tpu_custom_call.1}
  #allocation0 [shape = 'u32[]', space=smem, size = 0x4, offset = 0x4, fixed_abs, tag = 'smem constant byte address 0x4 - core index']
  #allocation1 [shape = 'u32[144,128]{1,0:T(1,128)}', space=vmem, size = 0x12000, scoped, tag = 'internal scratch']
  %s0 = inlined_call_operand.hbm [shape: f32[8,128], index: 0, kind: input, shape index: {}]
  %s1 = inlined_call_operand.hbm [shape: f32[8,128], index: 1, kind: output, shape index: {}]
  %s2 = sld [smem:[#allocation0]]
  $region18: #{tpu_custom_call.1} parent=0
    _
  %s4 = ssub.s32 1, %s2
  %s5 = scalar_select 0, %s4, %s2
  $region1: #{tpu_custom_call.1} parent=0
    #allocation2 [shape = 'u8[4096]{0}', space=vmem, size = 0x1000, scoped, tag = 'input window, operand 0, single buffered']
    #allocation3 [shape = 's32[1]{0}', space=sflag, size = 0x4, scoped, tag = 'scoped memory for tpu_custom_call.1']
    #allocation4 [shape = 's32[1]{0}', space=sflag, size = 0x4, scoped, tag = 'scoped memory for tpu_custom_call.1']
    #allocation5 [shape = 'u8[4096]{0}', space=vmem, size = 0x1000, scoped, tag = 'output window, operand 0, single buffered']
    %6 = vsyncpa [#allocation3], 0
    %7 = vsyncpa [#allocation4], 0
    // Predicated region
    $region2: #{tpu_custom_call.1} parent=1 // pred_check
      _
    $region3: #{tpu_custom_call.1} parent=1 // pred_check_branch
      %9 = sbr.rel (0) target = $region5
    $region4: #{tpu_custom_call.1} parent=1 // pred_region
      %s11 = ssub.s32 128, 128
      %12 = vsyncadd [#allocation3], %s11
      %s14 = sshll.u32 [#allocation2], 4
      %s15 = int_to_ptr.vmem [resolvable:$true] %s14
      %17 = dma.hbm_to_vmem [thread:$0]  %s0, 128, %s15, [#allocation3]
    $region5: #{tpu_custom_call.1} parent=1 // pred_fallthru
      _
    // Predicated region
    $region6: #{tpu_custom_call.1} parent=1 // pred_check
      _
    $region7: #{tpu_custom_call.1} parent=1 // pred_check_branch
      %19 = sbr.rel (0) target = $region9
    $region8: #{tpu_custom_call.1} parent=1 // pred_region
      %20 = dma.done [#allocation3], 128
    $region9: #{tpu_custom_call.1} parent=1 // pred_fallthru
      _
    %v21 = vld [vmem:[#allocation2] sm:$0xff]
    %v22 = vrot.slane %v21, 7
    %23 = vst [vmem:[#allocation5] sm:$0xff] %v22
    // Predicated region
    $region10: #{tpu_custom_call.1} parent=1 // pred_check
      _
    $region11: #{tpu_custom_call.1} parent=1 // pred_check_branch
      %25 = sbr.rel (0) target = $region13
    $region12: #{tpu_custom_call.1} parent=1 // pred_region
      %s27 = ssub.s32 128, 128
      %28 = vsyncadd [#allocation4], %s27
      %s30 = sshll.u32 [#allocation5], 4
      %s31 = int_to_ptr.vmem [resolvable:$true] %s30
      %33 = dma.vmem_to_hbm [thread:$0]  %s31, 128, %s1, [#allocation4]
    $region13: #{tpu_custom_call.1} parent=1 // pred_fallthru
      _
    // Predicated region
    $region14: #{tpu_custom_call.1} parent=1 // pred_check
      _
    $region15: #{tpu_custom_call.1} parent=1 // pred_check_branch
      %35 = sbr.rel (0) target = $region17
    $region16: #{tpu_custom_call.1} parent=1 // pred_region
      %36 = dma.done [#allocation4], 128
    $region17: #{tpu_custom_call.1} parent=1 // pred_fallthru
      _
    %37 = vsyncpa [#allocation3], 1
    %38 = vsyncpa [#allocation4], 1

</llo_original>
